<compile_context>
chip_gen: v7x
topology: tpu7x:2x2x1
jax: 0.10.0
libtpu: 0.0.40
codegen_flags: <defaults>
</compile_context>

<pallas_src>
import functools

import jax
import jax.numpy as jnp
from jax.experimental import pallas as pl
from jax.experimental.pallas import tpu as pltpu

_LANE = 128      # lane width: hidden feature dims padded to this (exact for Linear+ReLU)
_ROW = 16        # batch-row granularity (covers bf16 sublane packing and f32 (8,128))


def _round_up(n, m):
    return ((n + m - 1) // m) * m


def _pad2d(a, rows, cols):
    r, c = a.shape
    if r == rows and c == cols:
        return a
    return jnp.pad(a, ((0, rows - r), (0, cols - c)))


# ---------------------------------------------------------------------------
# Kernel: fused 5-layer MLP (4x Linear+ReLU + final Linear). Dropout = identity.
# MXU operands in the weight dtype (bf16 by default), f32 accumulation via
# preferred_element_type; bias-add / ReLU in f32.
# ---------------------------------------------------------------------------
def _mlp_kernel(x_ref,
                w1_ref, b1_ref, w2_ref, b2_ref, w3_ref, b3_ref,
                w4_ref, b4_ref, wo_ref, bo_ref,
                out_ref):
    cdt = w1_ref.dtype

    h = jnp.dot(x_ref[...], w1_ref[...],
                preferred_element_type=jnp.float32) + b1_ref[...]
    h = jnp.maximum(h, 0.0)

    h = jnp.dot(h.astype(cdt), w2_ref[...],
                preferred_element_type=jnp.float32) + b2_ref[...]
    h = jnp.maximum(h, 0.0)

    h = jnp.dot(h.astype(cdt), w3_ref[...],
                preferred_element_type=jnp.float32) + b3_ref[...]
    h = jnp.maximum(h, 0.0)

    h = jnp.dot(h.astype(cdt), w4_ref[...],
                preferred_element_type=jnp.float32) + b4_ref[...]
    h = jnp.maximum(h, 0.0)

    out = jnp.dot(h.astype(cdt), wo_ref[...],
                  preferred_element_type=jnp.float32) + bo_ref[...]
    out_ref[...] = out.astype(out_ref.dtype)


# ---------------------------------------------------------------------------
# Trace-time capability / hardware queries (no device execution).
# ---------------------------------------------------------------------------
@functools.lru_cache(maxsize=None)
def _weight_single_buffer_ok():
    """Can BlockSpec take pipeline_mode=pl.Buffered(1)?  Checked by lowering a
    tiny pallas_call (trace-time only, nothing runs on the chip)."""
    if not hasattr(pl, "Buffered"):
        return False
    try:
        spec = pl.BlockSpec((8, 128), lambda i: (0, 0),
                            pipeline_mode=pl.Buffered(1))

        def _copy(a_ref, o_ref):
            o_ref[...] = a_ref[...]

        fn = pl.pallas_call(
            _copy,
            out_shape=jax.ShapeDtypeStruct((8, 128), jnp.float32),
            grid_spec=pltpu.PrefetchScalarGridSpec(
                num_scalar_prefetch=0, grid=(1,),
                in_specs=[spec],
                out_specs=pl.BlockSpec((8, 128), lambda i: (0, 0))),
        )
        jax.jit(fn).lower(jax.ShapeDtypeStruct((8, 128), jnp.float32))
        return True
    except Exception:
        return False


@functools.lru_cache(maxsize=None)
def _vmem_capacity_bytes():
    try:
        return int(pltpu.get_tpu_info().vmem_capacity_bytes)
    except Exception:
        return 64 << 20   # conservative: v7x per-TensorCore capacity


# ---------------------------------------------------------------------------
# Parameter preparation (hoist pad/cast out of the per-call path).
# ---------------------------------------------------------------------------
def prepare_params(params, compute_dtype=jnp.bfloat16):
    """Pad/cast weights once and reuse across calls.

    * w1 keeps its true row count (= input_size): the first matmul's K dim is
      NOT zero-padded, so x streams from HBM at its true width.
    * Hidden feature dims are zero-padded to 128-lane multiples (exact for a
      Linear+ReLU chain: padded lanes stay identically zero).
    * The output dim keeps its true size (no inflated writeback).
    * Weights stored in compute_dtype (bf16 default); biases stay f32.
    """
    d_in = params["w1"].shape[0]
    d_out = params["wo"].shape[1]
    in_dims = {"1": d_in,
               "2": _round_up(params["w2"].shape[0], _LANE),
               "3": _round_up(params["w3"].shape[0], _LANE),
               "4": _round_up(params["w4"].shape[0], _LANE),
               "o": _round_up(params["wo"].shape[0], _LANE)}
    out_dims = {"1": _round_up(params["w1"].shape[1], _LANE),
                "2": _round_up(params["w2"].shape[1], _LANE),
                "3": _round_up(params["w3"].shape[1], _LANE),
                "4": _round_up(params["w4"].shape[1], _LANE),
                "o": d_out}
    flat = []
    for n in ("1", "2", "3", "4", "o"):
        w = params[f"w{n}"].astype(jnp.float32)
        b = params[f"b{n}"].astype(jnp.float32).reshape(1, -1)
        flat.append(_pad2d(w, in_dims[n], out_dims[n]).astype(compute_dtype))
        flat.append(_pad2d(b, 1, out_dims[n]))
    return tuple(flat)


# ---------------------------------------------------------------------------
# Jitted forward: pad/cast x + pallas_call + row slice all under one jit.
# ---------------------------------------------------------------------------
@functools.partial(jax.jit, static_argnames=("batch_tile",))
def _forward(x, params_flat, *, batch_tile):
    w1, b1, w2, b2, w3, b3, w4, b4, wo, bo = params_flat
    B, D_in = x.shape
    D_out = wo.shape[1]
    cdt = w1.dtype

    # --- batch tile selection -------------------------------------------
    Bp_min = _round_up(max(B, _ROW), _ROW)
    bt = max(_ROW, (min(int(batch_tile), Bp_min) // _ROW) * _ROW)
    if bt >= Bp_min and Bp_min >= 2 * _ROW:
        # A single-step grid would leave one v7x TensorCore idle: split it.
        bt = max(_ROW, (Bp_min // 2) // _ROW * _ROW)
    Bp = _round_up(B, bt)
    grid = (Bp // bt,)

    # x: cast to compute dtype (halves the dominant HBM stream), pad rows
    # only; the contraction dim keeps its true size (no K padding in HBM).
    x_p = _pad2d(x.astype(cdt), Bp, D_in)

    # --- VMEM-resident weights / biases -----------------------------------
    resident_ops = [w1, b1, w2, b2, w3, b3, w4, b4, wo, bo]
    single_buf = _weight_single_buffer_ok()
    if single_buf:
        def resident(a):
            return pl.BlockSpec(a.shape, lambda i: (0, 0),
                                pipeline_mode=pl.Buffered(1))
    else:
        def resident(a):
            return pl.BlockSpec(a.shape, lambda i: (0, 0))

    # --- scheduler hint + VMEM budget --------------------------------------
    flops = 2 * Bp * sum(int(w.shape[0]) * int(w.shape[1])
                         for w in (w1, w2, w3, w4, wo))
    bytes_accessed = (int(x_p.size) * x_p.dtype.itemsize
                      + sum(int(a.size) * a.dtype.itemsize for a in resident_ops)
                      + Bp * D_out * 4)
    cost = pl.CostEstimate(flops=flops, transcendentals=0,
                           bytes_accessed=bytes_accessed)

    n_buf = 1 if single_buf else 2
    max_w = max(int(w.shape[1]) for w in (w1, w2, w3, w4, wo))
    vmem_need = (n_buf * sum(int(a.size) * a.dtype.itemsize for a in resident_ops)
                 + 2 * bt * D_in * x_p.dtype.itemsize     # double-buffered x tile
                 + 2 * bt * D_out * 4                     # double-buffered out tile
                 + 6 * bt * max_w * 4                     # live f32 intermediates
                 + (4 << 20))                             # headroom
    cap = _vmem_capacity_bytes() - (8 << 20)
    vmem_limit = int(min(max(vmem_need, 32 << 20), cap))

    out_p = pl.pallas_call(
        _mlp_kernel,
        out_shape=jax.ShapeDtypeStruct((Bp, D_out), jnp.float32),
        grid_spec=pltpu.PrefetchScalarGridSpec(
            num_scalar_prefetch=0,
            grid=grid,
            in_specs=[pl.BlockSpec((bt, D_in), lambda i: (i, 0))]
                     + [resident(a) for a in resident_ops],
            out_specs=pl.BlockSpec((bt, D_out), lambda i: (i, 0)),
        ),
        compiler_params=pltpu.CompilerParams(
            dimension_semantics=("parallel",),
            vmem_limit_bytes=vmem_limit),
        cost_estimate=cost,
    )(x_p, *resident_ops)

    return out_p[:B]


def mlp_predict_adj(x, params, *, batch_tile=512, compute_dtype=jnp.bfloat16):
    """Forward pass of MLPPredictAdj (eval mode: dropout = identity).

    `params` may be the raw dict from init_params (prepared on the fly) or the
    tuple returned by prepare_params (preferred: prepare once, reuse).
    bf16 operands / f32 accumulation; pass compute_dtype=jnp.float32 for a
    full-precision path.
    """
    if isinstance(params, dict):
        params = prepare_params(params, compute_dtype)
    return _forward(x, params, batch_tile=int(batch_tile))


# ---------------------------------------------------------------------------
# Deterministic init + plain-JAX reference (same bf16-operand math).
# ---------------------------------------------------------------------------
def init_params(key, input_size, hidden_channels, output_size):
    """Weights stored transposed as (in_features, out_features); biases (1, out)."""
    dims = [
        (input_size, hidden_channels),                  # fc1
        (hidden_channels, hidden_channels),             # fc2
        (hidden_channels, hidden_channels // 2),        # fc3
        (hidden_channels // 2, hidden_channels // 4),   # fc4
        (hidden_channels // 4, output_size),            # fc_out
    ]
    names = ["1", "2", "3", "4", "o"]
    params = {}
    for name, (din, dout) in zip(names, dims):
        key, kw, kb = jax.random.split(key, 3)
        bound = float(din) ** -0.5  # PyTorch-style uniform bound
        params[f"w{name}"] = jax.random.uniform(
            kw, (din, dout), jnp.float32, -bound, bound)
        params[f"b{name}"] = jax.random.uniform(
            kb, (1, dout), jnp.float32, -bound, bound)
    return params


def mlp_ref(x, params, compute_dtype=jnp.bfloat16):
    """Plain-JAX reference with the same bf16-operand / f32-accumulate math
    (dropout = identity)."""
    def lin(h, w, b):
        return jnp.dot(h.astype(compute_dtype), w.astype(compute_dtype),
                       preferred_element_type=jnp.float32) + b
    h = jnp.maximum(lin(x, params["w1"], params["b1"]), 0.0)
    h = jnp.maximum(lin(h, params["w2"], params["b2"]), 0.0)
    h = jnp.maximum(lin(h, params["w3"], params["b3"]), 0.0)
    h = jnp.maximum(lin(h, params["w4"], params["b4"]), 0.0)
    return lin(h, params["wo"], params["bo"])


if __name__ == "__main__":
    key = jax.random.PRNGKey(0)

    # Small, module-consistent shapes; batch pads/tiles so the grid has 2
    # steps (exercising the pipelined / megacore-shardable path).
    batch = 32
    input_size = 16
    hidden_channels = 32
    output_size = input_size

    kx, kp = jax.random.split(key)
    x = jax.random.normal(kx, (batch, input_size), jnp.float32)
    params = init_params(kp, input_size, hidden_channels, output_size)

    prepared = prepare_params(params)               # hoisted pad/cast (once)
    out = mlp_predict_adj(x, prepared)              # jitted pad + kernel + slice
    out = jax.block_until_ready(out)

    ref = mlp_ref(x, params)
    assert out.shape == (batch, output_size)
    assert jnp.allclose(out, ref, atol=5e-3, rtol=5e-3), "mismatch vs reference"

    print("KERNEL_OK")
</pallas_src>

<mosaic_0001>
module attributes {stable_mosaic.version = 11 : i64} {
  func.func @_mlp_kernel(%arg0: i32, %arg1: memref<16x16xbf16, #tpu.memory_space<vmem>>, %arg2: memref<16x128xbf16, #tpu.memory_space<vmem>>, %arg3: memref<1x128xf32, #tpu.memory_space<vmem>>, %arg4: memref<128x128xbf16, #tpu.memory_space<vmem>>, %arg5: memref<1x128xf32, #tpu.memory_space<vmem>>, %arg6: memref<128x128xbf16, #tpu.memory_space<vmem>>, %arg7: memref<1x128xf32, #tpu.memory_space<vmem>>, %arg8: memref<128x128xbf16, #tpu.memory_space<vmem>>, %arg9: memref<1x128xf32, #tpu.memory_space<vmem>>, %arg10: memref<128x16xbf16, #tpu.memory_space<vmem>>, %arg11: memref<1x16xf32, #tpu.memory_space<vmem>>, %arg12: memref<16x16xf32, #tpu.memory_space<vmem>>) attributes {dimension_semantics = [#tpu.dimension_semantics<parallel>], iteration_bounds = array<i64: 2>, scalar_prefetch = 0 : i64, scratch_operands = 0 : i64, tpu.core_type = #tpu.core_type<tc>, window_params = [{transform_indices = @transform_0, window_bounds = array<i64: 16, 16>}, {pipeline_mode = #tpu.pipeline_mode<synchronous>, transform_indices = @transform_1, window_bounds = array<i64: 16, 128>}, {pipeline_mode = #tpu.pipeline_mode<synchronous>, transform_indices = @transform_2, window_bounds = array<i64: 1, 128>}, {pipeline_mode = #tpu.pipeline_mode<synchronous>, transform_indices = @transform_3, window_bounds = array<i64: 128, 128>}, {pipeline_mode = #tpu.pipeline_mode<synchronous>, transform_indices = @transform_4, window_bounds = array<i64: 1, 128>}, {pipeline_mode = #tpu.pipeline_mode<synchronous>, transform_indices = @transform_5, window_bounds = array<i64: 128, 128>}, {pipeline_mode = #tpu.pipeline_mode<synchronous>, transform_indices = @transform_6, window_bounds = array<i64: 1, 128>}, {pipeline_mode = #tpu.pipeline_mode<synchronous>, transform_indices = @transform_7, window_bounds = array<i64: 128, 128>}, {pipeline_mode = #tpu.pipeline_mode<synchronous>, transform_indices = @transform_8, window_bounds = array<i64: 1, 128>}, {pipeline_mode = #tpu.pipeline_mode<synchronous>, transform_indices = @transform_9, window_bounds = array<i64: 128, 16>}, {pipeline_mode = #tpu.pipeline_mode<synchronous>, transform_indices = @transform_10, window_bounds = array<i64: 1, 16>}, {transform_indices = @transform_11, window_bounds = array<i64: 16, 16>}]} {
    %c0 = arith.constant 0 : index
    %c0_0 = arith.constant 0 : index
    %0 = vector.load %arg1[%c0, %c0_0] : memref<16x16xbf16, #tpu.memory_space<vmem>>, vector<16x16xbf16>
    %c0_1 = arith.constant 0 : index
    %c0_2 = arith.constant 0 : index
    %1 = vector.load %arg2[%c0_1, %c0_2] : memref<16x128xbf16, #tpu.memory_space<vmem>>, vector<16x128xbf16>
    %cst = arith.constant dense<0.000000e+00> : vector<16x128xf32>
    %2 = tpu.matmul %0, %1, %cst {dimension_numbers = #tpu.dot_dimension_numbers<[1], [0], [0], [1], [0, 0, 1, 1], [], []>} : vector<16x16xbf16>, vector<16x128xbf16>, vector<16x128xf32> -> vector<16x128xf32>
    %c0_3 = arith.constant 0 : index
    %c0_4 = arith.constant 0 : index
    %3 = vector.load %arg3[%c0_3, %c0_4] : memref<1x128xf32, #tpu.memory_space<vmem>>, vector<1x128xf32>
    %4 = vector.broadcast %3 : vector<1x128xf32> to vector<16x128xf32>
    %5 = arith.addf %2, %4 : vector<16x128xf32>
    %cst_5 = arith.constant 0.000000e+00 : f32
    %6 = vector.broadcast %cst_5 : f32 to vector<16x128xf32>
    %7 = arith.maximumf %5, %6 : vector<16x128xf32>
    %8 = arith.truncf %7 : vector<16x128xf32> to vector<16x128xbf16>
    %c0_6 = arith.constant 0 : index
    %c0_7 = arith.constant 0 : index
    %9 = vector.load %arg4[%c0_6, %c0_7] : memref<128x128xbf16, #tpu.memory_space<vmem>>, vector<128x128xbf16>
    %cst_8 = arith.constant dense<0.000000e+00> : vector<16x128xf32>
    %10 = tpu.matmul %8, %9, %cst_8 {dimension_numbers = #tpu.dot_dimension_numbers<[1], [0], [0], [1], [0, 0, 1, 1], [], []>} : vector<16x128xbf16>, vector<128x128xbf16>, vector<16x128xf32> -> vector<16x128xf32>
    %c0_9 = arith.constant 0 : index
    %c0_10 = arith.constant 0 : index
    %11 = vector.load %arg5[%c0_9, %c0_10] : memref<1x128xf32, #tpu.memory_space<vmem>>, vector<1x128xf32>
    %12 = vector.broadcast %11 : vector<1x128xf32> to vector<16x128xf32>
    %13 = arith.addf %10, %12 : vector<16x128xf32>
    %cst_11 = arith.constant 0.000000e+00 : f32
    %14 = vector.broadcast %cst_11 : f32 to vector<16x128xf32>
    %15 = arith.maximumf %13, %14 : vector<16x128xf32>
    %16 = arith.truncf %15 : vector<16x128xf32> to vector<16x128xbf16>
    %c0_12 = arith.constant 0 : index
    %c0_13 = arith.constant 0 : index
    %17 = vector.load %arg6[%c0_12, %c0_13] : memref<128x128xbf16, #tpu.memory_space<vmem>>, vector<128x128xbf16>
    %cst_14 = arith.constant dense<0.000000e+00> : vector<16x128xf32>
    %18 = tpu.matmul %16, %17, %cst_14 {dimension_numbers = #tpu.dot_dimension_numbers<[1], [0], [0], [1], [0, 0, 1, 1], [], []>} : vector<16x128xbf16>, vector<128x128xbf16>, vector<16x128xf32> -> vector<16x128xf32>
    %c0_15 = arith.constant 0 : index
    %c0_16 = arith.constant 0 : index
    %19 = vector.load %arg7[%c0_15, %c0_16] : memref<1x128xf32, #tpu.memory_space<vmem>>, vector<1x128xf32>
    %20 = vector.broadcast %19 : vector<1x128xf32> to vector<16x128xf32>
    %21 = arith.addf %18, %20 : vector<16x128xf32>
    %cst_17 = arith.constant 0.000000e+00 : f32
    %22 = vector.broadcast %cst_17 : f32 to vector<16x128xf32>
    %23 = arith.maximumf %21, %22 : vector<16x128xf32>
    %24 = arith.truncf %23 : vector<16x128xf32> to vector<16x128xbf16>
    %c0_18 = arith.constant 0 : index
    %c0_19 = arith.constant 0 : index
    %25 = vector.load %arg8[%c0_18, %c0_19] : memref<128x128xbf16, #tpu.memory_space<vmem>>, vector<128x128xbf16>
    %cst_20 = arith.constant dense<0.000000e+00> : vector<16x128xf32>
    %26 = tpu.matmul %24, %25, %cst_20 {dimension_numbers = #tpu.dot_dimension_numbers<[1], [0], [0], [1], [0, 0, 1, 1], [], []>} : vector<16x128xbf16>, vector<128x128xbf16>, vector<16x128xf32> -> vector<16x128xf32>
    %c0_21 = arith.constant 0 : index
    %c0_22 = arith.constant 0 : index
    %27 = vector.load %arg9[%c0_21, %c0_22] : memref<1x128xf32, #tpu.memory_space<vmem>>, vector<1x128xf32>
    %28 = vector.broadcast %27 : vector<1x128xf32> to vector<16x128xf32>
    %29 = arith.addf %26, %28 : vector<16x128xf32>
    %cst_23 = arith.constant 0.000000e+00 : f32
    %30 = vector.broadcast %cst_23 : f32 to vector<16x128xf32>
    %31 = arith.maximumf %29, %30 : vector<16x128xf32>
    %32 = arith.truncf %31 : vector<16x128xf32> to vector<16x128xbf16>
    %c0_24 = arith.constant 0 : index
    %c0_25 = arith.constant 0 : index
    %33 = vector.load %arg10[%c0_24, %c0_25] : memref<128x16xbf16, #tpu.memory_space<vmem>>, vector<128x16xbf16>
    %cst_26 = arith.constant dense<0.000000e+00> : vector<16x16xf32>
    %34 = tpu.matmul %32, %33, %cst_26 {dimension_numbers = #tpu.dot_dimension_numbers<[1], [0], [0], [1], [0, 0, 1, 1], [], []>} : vector<16x128xbf16>, vector<128x16xbf16>, vector<16x16xf32> -> vector<16x16xf32>
    %c0_27 = arith.constant 0 : index
    %c0_28 = arith.constant 0 : index
    %35 = vector.load %arg11[%c0_27, %c0_28] : memref<1x16xf32, #tpu.memory_space<vmem>>, vector<1x16xf32>
    %36 = vector.broadcast %35 : vector<1x16xf32> to vector<16x16xf32>
    %37 = arith.addf %34, %36 : vector<16x16xf32>
    %c0_29 = arith.constant 0 : index
    %c0_30 = arith.constant 0 : index
    %38 = vector.load %arg12[%c0_29, %c0_30] : memref<16x16xf32, #tpu.memory_space<vmem>>, vector<16x16xf32>
    tpu.vector_store %arg12[%c0_29, %c0_30], %37 {strides = array<i32>} : memref<16x16xf32, #tpu.memory_space<vmem>>, vector<16x16xf32>,
    return
  }
  func.func @transform_0(%arg0: i32) -> (i32, i32) {
    %c0_i32 = arith.constant 0 : i32
    %c0_i32_0 = arith.constant 0 : i32
    return %arg0, %c0_i32 : i32, i32
  }
  func.func @transform_1(%arg0: i32) -> (i32, i32) {
    %c0_i32 = arith.constant 0 : i32
    %c0_i32_0 = arith.constant 0 : i32
    %c0_i32_1 = arith.constant 0 : i32
    return %c0_i32, %c0_i32_0 : i32, i32
  }
  func.func @transform_2(%arg0: i32) -> (i32, i32) {
    %c0_i32 = arith.constant 0 : i32
    %c0_i32_0 = arith.constant 0 : i32
    %c0_i32_1 = arith.constant 0 : i32
    return %c0_i32, %c0_i32_0 : i32, i32
  }
  func.func @transform_3(%arg0: i32) -> (i32, i32) {
    %c0_i32 = arith.constant 0 : i32
    %c0_i32_0 = arith.constant 0 : i32
    %c0_i32_1 = arith.constant 0 : i32
    return %c0_i32, %c0_i32_0 : i32, i32
  }
  func.func @transform_4(%arg0: i32) -> (i32, i32) {
    %c0_i32 = arith.constant 0 : i32
    %c0_i32_0 = arith.constant 0 : i32
    %c0_i32_1 = arith.constant 0 : i32
    return %c0_i32, %c0_i32_0 : i32, i32
  }
  func.func @transform_5(%arg0: i32) -> (i32, i32) {
    %c0_i32 = arith.constant 0 : i32
    %c0_i32_0 = arith.constant 0 : i32
    %c0_i32_1 = arith.constant 0 : i32
    return %c0_i32, %c0_i32_0 : i32, i32
  }
  func.func @transform_6(%arg0: i32) -> (i32, i32) {
    %c0_i32 = arith.constant 0 : i32
    %c0_i32_0 = arith.constant 0 : i32
    %c0_i32_1 = arith.constant 0 : i32
    return %c0_i32, %c0_i32_0 : i32, i32
  }
  func.func @transform_7(%arg0: i32) -> (i32, i32) {
    %c0_i32 = arith.constant 0 : i32
    %c0_i32_0 = arith.constant 0 : i32
    %c0_i32_1 = arith.constant 0 : i32
    return %c0_i32, %c0_i32_0 : i32, i32
  }
  func.func @transform_8(%arg0: i32) -> (i32, i32) {
    %c0_i32 = arith.constant 0 : i32
    %c0_i32_0 = arith.constant 0 : i32
    %c0_i32_1 = arith.constant 0 : i32
    return %c0_i32, %c0_i32_0 : i32, i32
  }
  func.func @transform_9(%arg0: i32) -> (i32, i32) {
    %c0_i32 = arith.constant 0 : i32
    %c0_i32_0 = arith.constant 0 : i32
    %c0_i32_1 = arith.constant 0 : i32
    return %c0_i32, %c0_i32_0 : i32, i32
  }
  func.func @transform_10(%arg0: i32) -> (i32, i32) {
    %c0_i32 = arith.constant 0 : i32
    %c0_i32_0 = arith.constant 0 : i32
    %c0_i32_1 = arith.constant 0 : i32
    return %c0_i32, %c0_i32_0 : i32, i32
  }
  func.func @transform_11(%arg0: i32) -> (i32, i32) {
    %c0_i32 = arith.constant 0 : i32
    %c0_i32_0 = arith.constant 0 : i32
    return %arg0, %c0_i32 : i32, i32
  }
}

</mosaic_0001>

<llo_original>
// kernel: _forward.1
$region0: #{_forward.1}
  #allocation0 [shape = 'u32[]', space=smem, size = 0x4, offset = 0x4, fixed_abs, tag = 'smem constant byte address 0x4 - core index']
  #allocation1 [shape = 'u32[144,128]{1,0:T(1,128)}', space=vmem, size = 0x12000, scoped, tag = 'internal scratch']
  %s0 = inlined_call_operand.vmem [shape: bf16[32,16], index: 0, kind: input, shape index: {}]
  %s1 = inlined_call_operand.hbm [shape: bf16[16,128], index: 1, kind: input, shape index: {}]
  %s2 = inlined_call_operand.vmem [shape: f32[1,128], index: 2, kind: input, shape index: {}]
  %s3 = inlined_call_operand.vmem [shape: bf16[128,128], index: 3, kind: input, shape index: {}]
  %s4 = inlined_call_operand.vmem [shape: f32[1,128], index: 4, kind: input, shape index: {}]
  %s5 = inlined_call_operand.vmem [shape: bf16[128,128], index: 5, kind: input, shape index: {}]
  %s6 = inlined_call_operand.vmem [shape: f32[1,128], index: 6, kind: input, shape index: {}]
  %s7 = inlined_call_operand.hbm [shape: bf16[128,128], index: 7, kind: input, shape index: {}]
  %s8 = inlined_call_operand.vmem [shape: f32[1,128], index: 8, kind: input, shape index: {}]
  %s9 = inlined_call_operand.vmem [shape: bf16[128,16], index: 9, kind: input, shape index: {}]
  %s10 = inlined_call_operand.vmem [shape: f32[1,16], index: 10, kind: input, shape index: {}]
  %s11 = inlined_call_operand.vmem [shape: f32[32,16], index: 11, kind: output, shape index: {}]
  %s12 = sld [smem:[#allocation0]]
  $region85: #{_forward.1} parent=0
    _
  %s14 = ssub.s32 1, %s12
  %s15 = scalar_select 0, %s14, %s12
  $region1: #{_forward.1} parent=0
    #allocation2 [shape = 'u8[4096]{0}', space=vmem, size = 0x1000, scoped, tag = 'input window, operand 1, single buffered']
    #allocation3 [shape = 's32[2]{0}', space=sflag, size = 0x8, scoped, tag = 'scoped memory for _forward.1']
    #allocation4 [shape = 'u8[32768]{0}', space=vmem, size = 0x8000, scoped, tag = 'input window, operand 7, single buffered']
    #allocation5 [shape = 's32[1]{0}', space=sflag, size = 0x4, scoped, tag = 'scoped memory for _forward.1']
    %16 = vsyncpa [#allocation3], 0
    %17 = vsyncpa [#allocation5], 0
    loop: start=0, step=1, limit=4
    $region2: #{_forward.1} parent=1 // loop_pre_header
      _
    $region3: #{_forward.1} parent=1 // loop_header
      %s19 = sphi 0, %s23
      %p20 = scmp.ge.s32.totalorder %s19, 4
      %s29 = sphi 0, %s31
      %s32 = sphi 0, %s29
      %s33 = sphi 0, %s32
      %s49 = sphi 0, %s33
      %s53 = sphi 0, %s53
      %s55 = sphi 0, %s53
      %s56 = sphi 0, %s55
      %s70 = sphi 0, %s56
      %s74 = sphi 0, %s74
      %s76 = sphi 0, %s74
      %s77 = sphi 0, %s76
      %s91 = sphi 0, %s77
      %s95 = sphi 0, %s95
      %s97 = sphi 0, %s95
      %s98 = sphi 0, %s97
      %s112 = sphi 0, %s98
      %s116 = sphi 0, %s116
      %s118 = sphi 0, %s116
      %s119 = sphi 0, %s118
      %s133 = sphi 0, %s119
      %s137 = sphi 0, %s137
      %s139 = sphi 0, %s137
      %s140 = sphi 0, %s139
      %s154 = sphi 0, %s140
      %s158 = sphi 0, %s158
      %s160 = sphi 0, %s158
      %s161 = sphi 0, %s160
      %s175 = sphi 0, %s161
      %s179 = sphi 0, %s179
      %s181 = sphi 0, %s179
      %s182 = sphi 0, %s181
      %s196 = sphi 0, %s182
      %s200 = sphi 0, %s200
      %s202 = sphi 0, %s200
      %s203 = sphi 0, %s202
      %s217 = sphi 0, %s203
      %s221 = sphi 0, %s221
      %s223 = sphi 0, %s221
      %s224 = sphi 0, %s223
      %s238 = sphi 0, %s224
      %s242 = sphi 0, %s242
      %s244 = sphi 0, %s242
      %s245 = sphi 0, %s244
      %s259 = sphi 0, %s245
      %s265 = sphi 0, %s267
      %s268 = sphi 0, %s265
      %s269 = sphi 0, %s268
      %s285 = sphi 0, %s269
    $region4: #{_forward.1} parent=1 // loop_header_branch
      %22 = sbr.rel (%p20) target = $region8
    $region5: #{_forward.1} parent=1 // loop_body
      %s24 = ssub.s32 %s19, 1
      %s25 = ssub.s32 %s19, 2
      %s26 = sadd.s32 %s19, 1
      %s27 = ssub.s32 %s19, %s26
      %p28 = scmp.eq.s32.totalorder %s27, 0
      %s30 = sadd.s32 %s29, 1
      %s31 = scalar_select %p28, %s29, %s30
      %p34 = pneg %p28
      %p35 = scmp.eq.s32.totalorder %s19, 1
      %p36 = por %p34, %p35
      %p37 = scmp.ne.s32.totalorder %s29, %s32
      %p38 = scmp.eq.s32.totalorder %s19, 0
      %p39 = por %p37, %p38
      %p40 = scmp.ne.s32.totalorder %s29, %s32
      %p41 = scmp.eq.s32.totalorder %s24, 1
      %p42 = por %p40, %p41
      %p43 = scmp.ne.s32.totalorder %s32, %s33
      %p44 = scmp.eq.s32.totalorder %s24, 0
      %p45 = por %p43, %p44
      %p46 = scmp.ne.s32.totalorder %s32, %s33
      %p47 = scmp.eq.s32.totalorder %s25, 1
      %p48 = por %p46, %p47
      %p50 = scmp.ne.s32.totalorder %s33, %s49
      %p51 = scmp.eq.s32.totalorder %s25, 0
      %p52 = por %p50, %p51
      %s54 = sadd.s32 %s53, 1
      %p57 = scmp.eq.s32.totalorder %s19, 1
      %p58 = scmp.ne.s32.totalorder %s53, %s55
      %p59 = scmp.eq.s32.totalorder %s19, 0
      %p60 = por %p58, %p59
      %p61 = scmp.ne.s32.totalorder %s53, %s55
      %p62 = scmp.eq.s32.totalorder %s24, 1
      %p63 = por %p61, %p62
      %p64 = scmp.ne.s32.totalorder %s55, %s56
      %p65 = scmp.eq.s32.totalorder %s24, 0
      %p66 = por %p64, %p65
      %p67 = scmp.ne.s32.totalorder %s55, %s56
      %p68 = scmp.eq.s32.totalorder %s25, 1
      %p69 = por %p67, %p68
      %p71 = scmp.ne.s32.totalorder %s56, %s70
      %p72 = scmp.eq.s32.totalorder %s25, 0
      %p73 = por %p71, %p72
      %s75 = sadd.s32 %s74, 1
      %p78 = scmp.eq.s32.totalorder %s19, 1
      %p79 = scmp.ne.s32.totalorder %s74, %s76
      %p80 = scmp.eq.s32.totalorder %s19, 0
      %p81 = por %p79, %p80
      %p82 = scmp.ne.s32.totalorder %s74, %s76
      %p83 = scmp.eq.s32.totalorder %s24, 1
      %p84 = por %p82, %p83
      %p85 = scmp.ne.s32.totalorder %s76, %s77
      %p86 = scmp.eq.s32.totalorder %s24, 0
      %p87 = por %p85, %p86
      %p88 = scmp.ne.s32.totalorder %s76, %s77
      %p89 = scmp.eq.s32.totalorder %s25, 1
      %p90 = por %p88, %p89
      %p92 = scmp.ne.s32.totalorder %s77, %s91
      %p93 = scmp.eq.s32.totalorder %s25, 0
      %p94 = por %p92, %p93
      %s96 = sadd.s32 %s95, 1
      %p99 = scmp.eq.s32.totalorder %s19, 1
      %p100 = scmp.ne.s32.totalorder %s95, %s97
      %p101 = scmp.eq.s32.totalorder %s19, 0
      %p102 = por %p100, %p101
      %p103 = scmp.ne.s32.totalorder %s95, %s97
      %p104 = scmp.eq.s32.totalorder %s24, 1
      %p105 = por %p103, %p104
      %p106 = scmp.ne.s32.totalorder %s97, %s98
      %p107 = scmp.eq.s32.totalorder %s24, 0
      %p108 = por %p106, %p107
      %p109 = scmp.ne.s32.totalorder %s97, %s98
      %p110 = scmp.eq.s32.totalorder %s25, 1
      %p111 = por %p109, %p110
      %p113 = scmp.ne.s32.totalorder %s98, %s112
      %p114 = scmp.eq.s32.totalorder %s25, 0
      %p115 = por %p113, %p114
      %s117 = sadd.s32 %s116, 1
      %p120 = scmp.eq.s32.totalorder %s19, 1
      %p121 = scmp.ne.s32.totalorder %s116, %s118
      %p122 = scmp.eq.s32.totalorder %s19, 0
      %p123 = por %p121, %p122
      %p124 = scmp.ne.s32.totalorder %s116, %s118
      %p125 = scmp.eq.s32.totalorder %s24, 1
      %p126 = por %p124, %p125
      %p127 = scmp.ne.s32.totalorder %s118, %s119
      %p128 = scmp.eq.s32.totalorder %s24, 0
      %p129 = por %p127, %p128
      %p130 = scmp.ne.s32.totalorder %s118, %s119
      %p131 = scmp.eq.s32.totalorder %s25, 1
      %p132 = por %p130, %p131
      %p134 = scmp.ne.s32.totalorder %s119, %s133
      %p135 = scmp.eq.s32.totalorder %s25, 0
      %p136 = por %p134, %p135
      %s138 = sadd.s32 %s137, 1
      %p141 = scmp.eq.s32.totalorder %s19, 1
      %p142 = scmp.ne.s32.totalorder %s137, %s139
      %p143 = scmp.eq.s32.totalorder %s19, 0
      %p144 = por %p142, %p143
      %p145 = scmp.ne.s32.totalorder %s137, %s139
      %p146 = scmp.eq.s32.totalorder %s24, 1
      %p147 = por %p145, %p146
      %p148 = scmp.ne.s32.totalorder %s139, %s140
      %p149 = scmp.eq.s32.totalorder %s24, 0
      %p150 = por %p148, %p149
      %p151 = scmp.ne.s32.totalorder %s139, %s140
      %p152 = scmp.eq.s32.totalorder %s25, 1
      %p153 = por %p151, %p152
      %p155 = scmp.ne.s32.totalorder %s140, %s154
      %p156 = scmp.eq.s32.totalorder %s25, 0
      %p157 = por %p155, %p156
      %s159 = sadd.s32 %s158, 1
      %p162 = scmp.eq.s32.totalorder %s19, 1
      %p163 = scmp.ne.s32.totalorder %s158, %s160
      %p164 = scmp.eq.s32.totalorder %s19, 0
      %p165 = por %p163, %p164
      %p166 = scmp.ne.s32.totalorder %s158, %s160
      %p167 = scmp.eq.s32.totalorder %s24, 1
      %p168 = por %p166, %p167
      %p169 = scmp.ne.s32.totalorder %s160, %s161
      %p170 = scmp.eq.s32.totalorder %s24, 0
      %p171 = por %p169, %p170
      %p172 = scmp.ne.s32.totalorder %s160, %s161
      %p173 = scmp.eq.s32.totalorder %s25, 1
      %p174 = por %p172, %p173
      %p176 = scmp.ne.s32.totalorder %s161, %s175
      %p177 = scmp.eq.s32.totalorder %s25, 0
      %p178 = por %p176, %p177
      %s180 = sadd.s32 %s179, 1
      %p183 = scmp.eq.s32.totalorder %s19, 1
      %p184 = scmp.ne.s32.totalorder %s179, %s181
      %p185 = scmp.eq.s32.totalorder %s19, 0
      %p186 = por %p184, %p185
      %p187 = scmp.ne.s32.totalorder %s179, %s181
      %p188 = scmp.eq.s32.totalorder %s24, 1
      %p189 = por %p187, %p188
      %p190 = scmp.ne.s32.totalorder %s181, %s182
      %p191 = scmp.eq.s32.totalorder %s24, 0
      %p192 = por %p190, %p191
      %p193 = scmp.ne.s32.totalorder %s181, %s182
      %p194 = scmp.eq.s32.totalorder %s25, 1
      %p195 = por %p193, %p194
      %p197 = scmp.ne.s32.totalorder %s182, %s196
      %p198 = scmp.eq.s32.totalorder %s25, 0
      %p199 = por %p197, %p198
      %s201 = sadd.s32 %s200, 1
      %p204 = scmp.eq.s32.totalorder %s19, 1
      %p205 = scmp.ne.s32.totalorder %s200, %s202
      %p206 = scmp.eq.s32.totalorder %s19, 0
      %p207 = por %p205, %p206
      %p208 = scmp.ne.s32.totalorder %s200, %s202
      %p209 = scmp.eq.s32.totalorder %s24, 1
      %p210 = por %p208, %p209
      %p211 = scmp.ne.s32.totalorder %s202, %s203
      %p212 = scmp.eq.s32.totalorder %s24, 0
      %p213 = por %p211, %p212
      %p214 = scmp.ne.s32.totalorder %s202, %s203
      %p215 = scmp.eq.s32.totalorder %s25, 1
      %p216 = por %p214, %p215
      %p218 = scmp.ne.s32.totalorder %s203, %s217
      %p219 = scmp.eq.s32.totalorder %s25, 0
      %p220 = por %p218, %p219
      %s222 = sadd.s32 %s221, 1
      %p225 = scmp.eq.s32.totalorder %s19, 1
      %p226 = scmp.ne.s32.totalorder %s221, %s223
      %p227 = scmp.eq.s32.totalorder %s19, 0
      %p228 = por %p226, %p227
      %p229 = scmp.ne.s32.totalorder %s221, %s223
      %p230 = scmp.eq.s32.totalorder %s24, 1
      %p231 = por %p229, %p230
      %p232 = scmp.ne.s32.totalorder %s223, %s224
      %p233 = scmp.eq.s32.totalorder %s24, 0
      %p234 = por %p232, %p233
      %p235 = scmp.ne.s32.totalorder %s223, %s224
      %p236 = scmp.eq.s32.totalorder %s25, 1
      %p237 = por %p235, %p236
      %p239 = scmp.ne.s32.totalorder %s224, %s238
      %p240 = scmp.eq.s32.totalorder %s25, 0
      %p241 = por %p239, %p240
      %s243 = sadd.s32 %s242, 1
      %p246 = scmp.eq.s32.totalorder %s19, 1
      %p247 = scmp.ne.s32.totalorder %s242, %s244
      %p248 = scmp.eq.s32.totalorder %s19, 0
      %p249 = por %p247, %p248
      %p250 = scmp.ne.s32.totalorder %s242, %s244
      %p251 = scmp.eq.s32.totalorder %s24, 1
      %p252 = por %p250, %p251
      %p253 = scmp.ne.s32.totalorder %s244, %s245
      %p254 = scmp.eq.s32.totalorder %s24, 0
      %p255 = por %p253, %p254
      %p256 = scmp.ne.s32.totalorder %s244, %s245
      %p257 = scmp.eq.s32.totalorder %s25, 1
      %p258 = por %p256, %p257
      %p260 = scmp.ne.s32.totalorder %s245, %s259
      %p261 = scmp.eq.s32.totalorder %s25, 0
      %p262 = por %p260, %p261
      %s263 = ssub.s32 %s19, %s26
      %p264 = scmp.eq.s32.totalorder %s263, 0
      %s266 = sadd.s32 %s265, 1
      %s267 = scalar_select %p264, %s265, %s266
      %p270 = pneg %p264
      %p271 = scmp.eq.s32.totalorder %s19, 1
      %p272 = por %p270, %p271
      %p273 = scmp.ne.s32.totalorder %s265, %s268
      %p274 = scmp.eq.s32.totalorder %s19, 0
      %p275 = por %p273, %p274
      %p276 = scmp.ne.s32.totalorder %s265, %s268
      %p277 = scmp.eq.s32.totalorder %s24, 1
      %p278 = por %p276, %p277
      %p279 = scmp.ne.s32.totalorder %s268, %s269
      %p280 = scmp.eq.s32.totalorder %s24, 0
      %p281 = por %p279, %p280
      %p282 = scmp.ne.s32.totalorder %s268, %s269
      %p283 = scmp.eq.s32.totalorder %s25, 1
      %p284 = por %p282, %p283
      %p286 = scmp.ne.s32.totalorder %s269, %s285
      %p287 = scmp.eq.s32.totalorder %s25, 0
      %p288 = por %p286, %p287
      %p289 = scmp.le.s32.totalorder 1, %s19
      %p290 = scmp.lt.s32.totalorder %s19, 3
      %p291 = pnand %p289, %p290
      %p292 = pneg %p291
      // Predicated region
      $region9: #{_forward.1} parent=5 // pred_check
        _
      $region10: #{_forward.1} parent=5 // pred_check_branch
        %294 = sbr.rel (%p291) target = $region12
      $region11: #{_forward.1} parent=5 // pred_region
        %s295 = ssub.s32 %s19, 1
        // Predicated region
        $region13: #{_forward.1} parent=11 // pred_check
          %p296 = pneg %p66
        $region14: #{_forward.1} parent=11 // pred_check_branch
          %298 = sbr.rel (%p296) target = $region16
        $region15: #{_forward.1} parent=11 // pred_region
          %s300 = ssub.s32 128, 128
          %301 = vsyncadd [#allocation3], %s300
          %s302 = sshll.u32 [#allocation2], 4
          %s303 = int_to_ptr.vmem [resolvable:$true] %s302
          %308 = dma.hbm_to_vmem [thread:$0]  %s1, 128, %s303, [#allocation3], 64, 64, 4
        $region16: #{_forward.1} parent=11 // pred_fallthru
          _
        // Predicated region
        $region17: #{_forward.1} parent=11 // pred_check
          %p309 = pneg %p87
        $region18: #{_forward.1} parent=11 // pred_check_branch
          %311 = sbr.rel (%p309) target = $region20
        $region19: #{_forward.1} parent=11 // pred_region
          _
        $region20: #{_forward.1} parent=11 // pred_fallthru
          _
        // Predicated region
        $region21: #{_forward.1} parent=11 // pred_check
          %p312 = pneg %p108
        $region22: #{_forward.1} parent=11 // pred_check_branch
          %314 = sbr.rel (%p312) target = $region24
        $region23: #{_forward.1} parent=11 // pred_region
          _
        $region24: #{_forward.1} parent=11 // pred_fallthru
          _
        // Predicated region
        $region25: #{_forward.1} parent=11 // pred_check
          %p315 = pneg %p129
        $region26: #{_forward.1} parent=11 // pred_check_branch
          %317 = sbr.rel (%p315) target = $region28
        $region27: #{_forward.1} parent=11 // pred_region
          _
        $region28: #{_forward.1} parent=11 // pred_fallthru
          _
        // Predicated region
        $region29: #{_forward.1} parent=11 // pred_check
          %p318 = pneg %p150
        $region30: #{_forward.1} parent=11 // pred_check_branch
          %320 = sbr.rel (%p318) target = $region32
        $region31: #{_forward.1} parent=11 // pred_region
          _
        $region32: #{_forward.1} parent=11 // pred_fallthru
          _
        // Predicated region
        $region33: #{_forward.1} parent=11 // pred_check
          %p321 = pneg %p171
        $region34: #{_forward.1} parent=11 // pred_check_branch
          %323 = sbr.rel (%p321) target = $region36
        $region35: #{_forward.1} parent=11 // pred_region
          _
        $region36: #{_forward.1} parent=11 // pred_fallthru
          _
        // Predicated region
        $region37: #{_forward.1} parent=11 // pred_check
          %p324 = pneg %p192
        $region38: #{_forward.1} parent=11 // pred_check_branch
          %326 = sbr.rel (%p324) target = $region40
        $region39: #{_forward.1} parent=11 // pred_region
          %s328 = ssub.s32 1024, 1024
          %329 = vsyncadd [#allocation5], %s328
          %s330 = sshll.u32 [#allocation4], 4
          %s331 = int_to_ptr.vmem [resolvable:$true] %s330
          %336 = dma.hbm_to_vmem [thread:$0]  %s7, 1024, %s331, [#allocation5], 64, 64, 4
        $region40: #{_forward.1} parent=11 // pred_fallthru
          _
        // Predicated region
        $region41: #{_forward.1} parent=11 // pred_check
          %p337 = pneg %p213
        $region42: #{_forward.1} parent=11 // pred_check_branch
          %339 = sbr.rel (%p337) target = $region44
        $region43: #{_forward.1} parent=11 // pred_region
          _
        $region44: #{_forward.1} parent=11 // pred_fallthru
          _
        // Predicated region
        $region45: #{_forward.1} parent=11 // pred_check
          %p340 = pneg %p234
        $region46: #{_forward.1} parent=11 // pred_check_branch
          %342 = sbr.rel (%p340) target = $region48
        $region47: #{_forward.1} parent=11 // pred_region
          _
        $region48: #{_forward.1} parent=11 // pred_fallthru
          _
        // Predicated region
        $region49: #{_forward.1} parent=11 // pred_check
          %p343 = pneg %p255
        $region50: #{_forward.1} parent=11 // pred_check_branch
          %345 = sbr.rel (%p343) target = $region52
        $region51: #{_forward.1} parent=11 // pred_region
          _
        $region52: #{_forward.1} parent=11 // pred_fallthru
          _
      $region12: #{_forward.1} parent=5 // pred_fallthru
        _
      %p346 = scmp.lt.s32.totalorder %s19, 2
      // Predicated region
      $region53: #{_forward.1} parent=5 // pred_check
        %p347 = pneg %p346
      $region54: #{_forward.1} parent=5 // pred_check_branch
        %349 = sbr.rel (%p347) target = $region56
      $region55: #{_forward.1} parent=5 // pred_region
        // Predicated region
        $region57: #{_forward.1} parent=55 // pred_check
          %p350 = pneg %p39
        $region58: #{_forward.1} parent=55 // pred_check_branch
          %352 = sbr.rel (%p350) target = $region60
        $region59: #{_forward.1} parent=55 // pred_region
          %s353 = smul.u32 2, %s19
          %p354 = scmp.lt.s32.totalorder %s353, 3
          %s355 = scalar_select %p354, %s353, 3
          %s356 = smul.addr %s355, 4
          %s357 = scalar_lea.vmem %s0, %s356
          %s358 = smul.u32 2, %s19
        $region60: #{_forward.1} parent=55 // pred_fallthru
          _
      $region56: #{_forward.1} parent=5 // pred_fallthru
        _
      %p359 = scmp.le.s32.totalorder 1, %s19
      %p360 = scmp.lt.s32.totalorder %s19, 3
      %p361 = pnand %p359, %p360
      %p362 = pneg %p361
      // Predicated region
      $region61: #{_forward.1} parent=5 // pred_check
        _
      $region62: #{_forward.1} parent=5 // pred_check_branch
        %364 = sbr.rel (%p361) target = $region64
      $region63: #{_forward.1} parent=5 // pred_region
        %s365 = ssub.s32 %s19, 1
        // Predicated region
        $region65: #{_forward.1} parent=63 // pred_check
          %p366 = pneg %p66
        $region66: #{_forward.1} parent=63 // pred_check_branch
          %368 = sbr.rel (%p366) target = $region68
        $region67: #{_forward.1} parent=63 // pred_region
          %369 = dma.done [#allocation3], 128
        $region68: #{_forward.1} parent=63 // pred_fallthru
          _
        // Predicated region
        $region69: #{_forward.1} parent=63 // pred_check
          %p370 = pneg %p192
        $region70: #{_forward.1} parent=63 // pred_check_branch
          %372 = sbr.rel (%p370) target = $region72
        $region71: #{_forward.1} parent=63 // pred_region
          %373 = dma.done [#allocation5], 1024
        $region72: #{_forward.1} parent=63 // pred_fallthru
          _
        %s374 = smul.u32 2, %s24
        %p375 = scmp.lt.s32.totalorder %s374, 3
        %s376 = scalar_select %p375, %s374, 3
        %s377 = smul.addr %s376, 4
        %s378 = scalar_lea.vmem %s0, %s377
        %p379 = pneg %p45
        %p380 = pneg %p42
        %p381 = pneg %p66
        %p382 = pneg %p63
        %p383 = pneg %p87
        %p384 = pneg %p84
        %p385 = pneg %p108
        %p386 = pneg %p105
        %p387 = pneg %p129
        %p388 = pneg %p126
        %p389 = pneg %p150
        %p390 = pneg %p147
        %p391 = pneg %p171
        %p392 = pneg %p168
        %p393 = pneg %p192
        %p394 = pneg %p189
        %p395 = pneg %p213
        %p396 = pneg %p210
        %p397 = pneg %p234
        %p398 = pneg %p231
        %p399 = pneg %p255
        %p400 = pneg %p252
        %p401 = pneg %p281
        %p402 = pneg %p278
        %s403 = smul.u32 2, %s24
        %p404 = scmp.lt.s32.totalorder %s403, 3
        %s405 = scalar_select %p404, %s403, 3
        %s406 = smul.addr %s405, 8
        %s407 = scalar_lea.vmem %s11, %s406
        %s408 = smul.u32 2, %s24
        %p409 = scmp.lt.s32.totalorder %s408, 3
        %s410 = scalar_select %p409, %s408, 3
        %s411 = smul.addr %s410, 4
        %s412 = scalar_lea.vmem %s0, %s411
        %s413 = smul.u32 2, %s24
        %s414 = smul.u32 2, %s24
        %p415 = scmp.lt.s32.totalorder %s414, 3
        %s416 = scalar_select %p415, %s414, 3
        %s417 = smul.addr %s416, 8
        %s418 = scalar_lea.vmem %s11, %s417
        %s419 = smul.u32 2, %s24
        %v421 = vld [vmem:[%s412] sm:$0xf]
        %v422 = vld [vmem:[%s412 + $0x4] sm:$0xf]
        %v423 = vld [vmem:[#allocation2] sm:$0xf]
        %v424 = vld [vmem:[#allocation2 + $0x4] sm:$0xf]
        %v425 = vld [vmem:[%s2] sm:$0x1]
        %v427 = vlaneseq
        %v428 = vshrl.u32 %v427, 7
        %v429 = vsub.s32 0, %v428
        %v430 = vrot.slane %v425, %v429
        %v434 = vunpack.c.l.b16 %v421
        %v435 = vunpack.c.l.b16 %v422
        %v436 = vpack.c.b16 %v435, %v434
        %v439 = vunpack.c.l.b16 %v423
        %v440 = vunpack.c.l.b16 %v424
        %v441 = vpack.c.b16 %v440, %v439
        %vm443 = vcmask 130048
        %v445 = vsel %vm443, %v436, 0
        %447 = vmatprep.subr.bf16.mxu0 0
        %448 = vmatpush1.bf16.msra.mxu0 %v441
        %449 = vmatprep.subr.bf16.mxu0 0
        %450 = vmatpush1.bf16.msra.mxu0 0
        %451 = vmatprep.subr.bf16.mxu0 0
        %452 = vmatpush1.bf16.msra.mxu0 0
        %453 = vmatprep.subr.bf16.mxu0 0
        %454 = vmatpush1.bf16.msra.mxu0 0
        %455 = vmatprep.subr.bf16.mxu0 0
        %456 = vmatpush1.bf16.msra.mxu0 0
        %457 = vmatprep.subr.bf16.mxu0 0
        %458 = vmatpush1.bf16.msra.mxu0 0
        %459 = vmatprep.subr.bf16.mxu0 0
        %460 = vmatpush1.bf16.msra.mxu0 0
        %461 = vmatprep.subr.bf16.mxu0 0
        %462 = vmatpush1.bf16.msra.mxu0 0
        %463 = vmatprep.subr.bf16.mxu0 0
        %464 = vmatpush1.bf16.msra.mxu0 0
        %465 = vmatprep.subr.bf16.mxu0 0
        %466 = vmatpush1.bf16.msra.mxu0 0
        %467 = vmatprep.subr.bf16.mxu0 0
        %468 = vmatpush1.bf16.msra.mxu0 0
        %469 = vmatprep.subr.bf16.mxu0 0
        %470 = vmatpush1.bf16.msra.mxu0 0
        %471 = vmatprep.subr.bf16.mxu0 0
        %472 = vmatpush1.bf16.msra.mxu0 0
        %473 = vmatprep.subr.bf16.mxu0 0
        %474 = vmatpush1.bf16.msra.mxu0 0
        %475 = vmatprep.subr.bf16.mxu0 0
        %476 = vmatpush1.bf16.msra.mxu0 0
        %477 = vmatprep.subr.bf16.mxu0 0
        %478 = vmatpush1.bf16.msra.mxu0 0
        %479 = vmatprep.mubr.bf16.mxu0 0
        %480 = vmatmul.mubr.bf16.gmra.mrb[0].mxu0 %v445
        %v481 = vpop.f32.mrb[0].mxu0
        %v482 = vadd.f32 %v430, %v481
        %v483 = vpop.f32.mrb[0].mxu0
        %v484 = vpop.f32.mrb[0].mxu0
        %v485 = vadd.f32 %v430, %v484
        %v486 = vpop.f32.mrb[0].mxu0
        %487 = vdwg.mxu0
        %v488 = vmax.f32 %v482, 0.0
        %v489 = vmax.f32 %v485, 0.0
        %v490 = vpack.c.bf16 %v489, %v488
        %v491 = vld [vmem:[%s3] sm:$0xf]
        %v492 = vld [vmem:[%s3 + $0x4] sm:$0xf]
        %v493 = vld [vmem:[%s3 + $0x8] sm:$0xf]
        %v494 = vld [vmem:[%s3 + $0xc] sm:$0xf]
        %v495 = vld [vmem:[%s3 + $0x10] sm:$0xf]
        %v496 = vld [vmem:[%s3 + $0x14] sm:$0xf]
        %v497 = vld [vmem:[%s3 + $0x18] sm:$0xf]
        %v498 = vld [vmem:[%s3 + $0x1c] sm:$0xf]
        %v499 = vld [vmem:[%s3 + $0x20] sm:$0xf]
        %v500 = vld [vmem:[%s3 + $0x24] sm:$0xf]
        %v501 = vld [vmem:[%s3 + $0x28] sm:$0xf]
        %v502 = vld [vmem:[%s3 + $0x2c] sm:$0xf]
        %v503 = vld [vmem:[%s3 + $0x30] sm:$0xf]
        %v504 = vld [vmem:[%s3 + $0x34] sm:$0xf]
        %v505 = vld [vmem:[%s3 + $0x38] sm:$0xf]
        %v506 = vld [vmem:[%s3 + $0x3c] sm:$0xf]
        %v507 = vld [vmem:[%s4] sm:$0x1]
        %v509 = vlaneseq
        %v510 = vshrl.u32 %v509, 7
        %v511 = vsub.s32 0, %v510
        %v512 = vrot.slane %v507, %v511
        %v530 = vunpack.c.l.b16 %v491
        %v531 = vunpack.c.l.b16 %v492
        %v532 = vunpack.c.l.b16 %v493
        %v533 = vunpack.c.l.b16 %v494
        %v534 = vunpack.c.l.b16 %v495
        %v535 = vunpack.c.l.b16 %v496
        %v536 = vunpack.c.l.b16 %v497
        %v537 = vunpack.c.l.b16 %v498
        %v538 = vunpack.c.l.b16 %v499
        %v539 = vunpack.c.l.b16 %v500
        %v540 = vunpack.c.l.b16 %v501
        %v541 = vunpack.c.l.b16 %v502
        %v542 = vunpack.c.l.b16 %v503
        %v543 = vunpack.c.l.b16 %v504
        %v544 = vunpack.c.l.b16 %v505
        %v545 = vunpack.c.l.b16 %v506
        %v546 = vpack.c.b16 %v531, %v530
        %v547 = vpack.c.b16 %v533, %v532
        %v548 = vpack.c.b16 %v535, %v534
        %v549 = vpack.c.b16 %v537, %v536
        %v550 = vpack.c.b16 %v539, %v538
        %v551 = vpack.c.b16 %v541, %v540
        %v552 = vpack.c.b16 %v543, %v542
        %v553 = vpack.c.b16 %v545, %v544
        %562 = vmatprep.subr.bf16.mxu0 0
        %563 = vmatpush1.bf16.msra.mxu0 %v546
        %564 = vmatprep.subr.bf16.mxu0 0
        %565 = vmatpush1.bf16.msra.mxu0 %v547
        %566 = vmatprep.subr.bf16.mxu0 0
        %567 = vmatpush1.bf16.msra.mxu0 %v548
        %568 = vmatprep.subr.bf16.mxu0 0
        %569 = vmatpush1.bf16.msra.mxu0 %v549
        %570 = vmatprep.subr.bf16.mxu0 0
        %571 = vmatpush1.bf16.msra.mxu0 %v550
        %572 = vmatprep.subr.bf16.mxu0 0
        %573 = vmatpush1.bf16.msra.mxu0 %v551
        %574 = vmatprep.subr.bf16.mxu0 0
        %575 = vmatpush1.bf16.msra.mxu0 %v552
        %576 = vmatprep.subr.bf16.mxu0 0
        %577 = vmatpush1.bf16.msra.mxu0 %v553
        %578 = vmatprep.subr.bf16.mxu0 0
        %579 = vmatpush1.bf16.msra.mxu0 0
        %580 = vmatprep.subr.bf16.mxu0 0
        %581 = vmatpush1.bf16.msra.mxu0 0
        %582 = vmatprep.subr.bf16.mxu0 0
        %583 = vmatpush1.bf16.msra.mxu0 0
        %584 = vmatprep.subr.bf16.mxu0 0
        %585 = vmatpush1.bf16.msra.mxu0 0
        %586 = vmatprep.subr.bf16.mxu0 0
        %587 = vmatpush1.bf16.msra.mxu0 0
        %588 = vmatprep.subr.bf16.mxu0 0
        %589 = vmatpush1.bf16.msra.mxu0 0
        %590 = vmatprep.subr.bf16.mxu0 0
        %591 = vmatpush1.bf16.msra.mxu0 0
        %592 = vmatprep.subr.bf16.mxu0 0
        %593 = vmatpush1.bf16.msra.mxu0 0
        %594 = vmatprep.mubr.bf16.mxu0 0
        %595 = vmatmul.mubr.bf16.gmra.mrb[0].mxu0 %v490
        %v596 = vpop.f32.mrb[0].mxu0
        %v597 = vadd.f32 %v512, %v596
        %v598 = vpop.f32.mrb[0].mxu0
        %v599 = vpop.f32.mrb[0].mxu0
        %v600 = vadd.f32 %v512, %v599
        %v601 = vpop.f32.mrb[0].mxu0
        %602 = vdwg.mxu0
        %v603 = vmax.f32 %v597, 0.0
        %v604 = vmax.f32 %v600, 0.0
        %v605 = vpack.c.bf16 %v604, %v603
        %v606 = vld [vmem:[%s5] sm:$0xf]
        %v607 = vld [vmem:[%s5 + $0x4] sm:$0xf]
        %v608 = vld [vmem:[%s5 + $0x8] sm:$0xf]
        %v609 = vld [vmem:[%s5 + $0xc] sm:$0xf]
        %v610 = vld [vmem:[%s5 + $0x10] sm:$0xf]
        %v611 = vld [vmem:[%s5 + $0x14] sm:$0xf]
        %v612 = vld [vmem:[%s5 + $0x18] sm:$0xf]
        %v613 = vld [vmem:[%s5 + $0x1c] sm:$0xf]
        %v614 = vld [vmem:[%s5 + $0x20] sm:$0xf]
        %v615 = vld [vmem:[%s5 + $0x24] sm:$0xf]
        %v616 = vld [vmem:[%s5 + $0x28] sm:$0xf]
        %v617 = vld [vmem:[%s5 + $0x2c] sm:$0xf]
        %v618 = vld [vmem:[%s5 + $0x30] sm:$0xf]
        %v619 = vld [vmem:[%s5 + $0x34] sm:$0xf]
        %v620 = vld [vmem:[%s5 + $0x38] sm:$0xf]
        %v621 = vld [vmem:[%s5 + $0x3c] sm:$0xf]
        %v622 = vld [vmem:[%s6] sm:$0x1]
        %v624 = vlaneseq
        %v625 = vshrl.u32 %v624, 7
        %v626 = vsub.s32 0, %v625
        %v627 = vrot.slane %v622, %v626
        %v645 = vunpack.c.l.b16 %v606
        %v646 = vunpack.c.l.b16 %v607
        %v647 = vunpack.c.l.b16 %v608
        %v648 = vunpack.c.l.b16 %v609
        %v649 = vunpack.c.l.b16 %v610
        %v650 = vunpack.c.l.b16 %v611
        %v651 = vunpack.c.l.b16 %v612
        %v652 = vunpack.c.l.b16 %v613
        %v653 = vunpack.c.l.b16 %v614
        %v654 = vunpack.c.l.b16 %v615
        %v655 = vunpack.c.l.b16 %v616
        %v656 = vunpack.c.l.b16 %v617
        %v657 = vunpack.c.l.b16 %v618
        %v658 = vunpack.c.l.b16 %v619
        %v659 = vunpack.c.l.b16 %v620
        %v660 = vunpack.c.l.b16 %v621
        %v661 = vpack.c.b16 %v646, %v645
        %v662 = vpack.c.b16 %v648, %v647
        %v663 = vpack.c.b16 %v650, %v649
        %v664 = vpack.c.b16 %v652, %v651
        %v665 = vpack.c.b16 %v654, %v653
        %v666 = vpack.c.b16 %v656, %v655
        %v667 = vpack.c.b16 %v658, %v657
        %v668 = vpack.c.b16 %v660, %v659
        %677 = vmatprep.subr.bf16.mxu0 0
        %678 = vmatpush1.bf16.msra.mxu0 %v661
        %679 = vmatprep.subr.bf16.mxu0 0
        %680 = vmatpush1.bf16.msra.mxu0 %v662
        %681 = vmatprep.subr.bf16.mxu0 0
        %682 = vmatpush1.bf16.msra.mxu0 %v663
        %683 = vmatprep.subr.bf16.mxu0 0
        %684 = vmatpush1.bf16.msra.mxu0 %v664
        %685 = vmatprep.subr.bf16.mxu0 0
        %686 = vmatpush1.bf16.msra.mxu0 %v665
        %687 = vmatprep.subr.bf16.mxu0 0
        %688 = vmatpush1.bf16.msra.mxu0 %v666
        %689 = vmatprep.subr.bf16.mxu0 0
        %690 = vmatpush1.bf16.msra.mxu0 %v667
        %691 = vmatprep.subr.bf16.mxu0 0
        %692 = vmatpush1.bf16.msra.mxu0 %v668
        %693 = vmatprep.subr.bf16.mxu0 0
        %694 = vmatpush1.bf16.msra.mxu0 0
        %695 = vmatprep.subr.bf16.mxu0 0
        %696 = vmatpush1.bf16.msra.mxu0 0
        %697 = vmatprep.subr.bf16.mxu0 0
        %698 = vmatpush1.bf16.msra.mxu0 0
        %699 = vmatprep.subr.bf16.mxu0 0
        %700 = vmatpush1.bf16.msra.mxu0 0
        %701 = vmatprep.subr.bf16.mxu0 0
        %702 = vmatpush1.bf16.msra.mxu0 0
        %703 = vmatprep.subr.bf16.mxu0 0
        %704 = vmatpush1.bf16.msra.mxu0 0
        %705 = vmatprep.subr.bf16.mxu0 0
        %706 = vmatpush1.bf16.msra.mxu0 0
        %707 = vmatprep.subr.bf16.mxu0 0
        %708 = vmatpush1.bf16.msra.mxu0 0
        %709 = vmatprep.mubr.bf16.mxu0 0
        %710 = vmatmul.mubr.bf16.gmra.mrb[0].mxu0 %v605
        %v711 = vpop.f32.mrb[0].mxu0
        %v712 = vadd.f32 %v627, %v711
        %v713 = vpop.f32.mrb[0].mxu0
        %v714 = vpop.f32.mrb[0].mxu0
        %v715 = vadd.f32 %v627, %v714
        %v716 = vpop.f32.mrb[0].mxu0
        %717 = vdwg.mxu0
        %v718 = vmax.f32 %v712, 0.0
        %v719 = vmax.f32 %v715, 0.0
        %v720 = vpack.c.bf16 %v719, %v718
        %v721 = vld [vmem:[#allocation4] sm:$0xf]
        %v722 = vld [vmem:[#allocation4 + $0x4] sm:$0xf]
        %v723 = vld [vmem:[#allocation4 + $0x8] sm:$0xf]
        %v724 = vld [vmem:[#allocation4 + $0xc] sm:$0xf]
        %v725 = vld [vmem:[#allocation4 + $0x10] sm:$0xf]
        %v726 = vld [vmem:[#allocation4 + $0x14] sm:$0xf]
        %v727 = vld [vmem:[#allocation4 + $0x18] sm:$0xf]
        %v728 = vld [vmem:[#allocation4 + $0x1c] sm:$0xf]
        %v729 = vld [vmem:[#allocation4 + $0x20] sm:$0xf]
        %v730 = vld [vmem:[#allocation4 + $0x24] sm:$0xf]
        %v731 = vld [vmem:[#allocation4 + $0x28] sm:$0xf]
        %v732 = vld [vmem:[#allocation4 + $0x2c] sm:$0xf]
        %v733 = vld [vmem:[#allocation4 + $0x30] sm:$0xf]
        %v734 = vld [vmem:[#allocation4 + $0x34] sm:$0xf]
        %v735 = vld [vmem:[#allocation4 + $0x38] sm:$0xf]
        %v736 = vld [vmem:[#allocation4 + $0x3c] sm:$0xf]
        %v737 = vld [vmem:[%s8] sm:$0x1]
        %v739 = vlaneseq
        %v740 = vshrl.u32 %v739, 7
        %v741 = vsub.s32 0, %v740
        %v742 = vrot.slane %v737, %v741
        %v760 = vunpack.c.l.b16 %v721
        %v761 = vunpack.c.l.b16 %v722
        %v762 = vunpack.c.l.b16 %v723
        %v763 = vunpack.c.l.b16 %v724
        %v764 = vunpack.c.l.b16 %v725
        %v765 = vunpack.c.l.b16 %v726
        %v766 = vunpack.c.l.b16 %v727
        %v767 = vunpack.c.l.b16 %v728
        %v768 = vunpack.c.l.b16 %v729
        %v769 = vunpack.c.l.b16 %v730
        %v770 = vunpack.c.l.b16 %v731
        %v771 = vunpack.c.l.b16 %v732
        %v772 = vunpack.c.l.b16 %v733
        %v773 = vunpack.c.l.b16 %v734
        %v774 = vunpack.c.l.b16 %v735
        %v775 = vunpack.c.l.b16 %v736
        %v776 = vpack.c.b16 %v761, %v760
        %v777 = vpack.c.b16 %v763, %v762
        %v778 = vpack.c.b16 %v765, %v764
        %v779 = vpack.c.b16 %v767, %v766
        %v780 = vpack.c.b16 %v769, %v768
        %v781 = vpack.c.b16 %v771, %v770
        %v782 = vpack.c.b16 %v773, %v772
        %v783 = vpack.c.b16 %v775, %v774
        %792 = vmatprep.subr.bf16.mxu0 0
        %793 = vmatpush1.bf16.msra.mxu0 %v776
        %794 = vmatprep.subr.bf16.mxu0 0
        %795 = vmatpush1.bf16.msra.mxu0 %v777
        %796 = vmatprep.subr.bf16.mxu0 0
        %797 = vmatpush1.bf16.msra.mxu0 %v778
        %798 = vmatprep.subr.bf16.mxu0 0
        %799 = vmatpush1.bf16.msra.mxu0 %v779
        %800 = vmatprep.subr.bf16.mxu0 0
        %801 = vmatpush1.bf16.msra.mxu0 %v780
        %802 = vmatprep.subr.bf16.mxu0 0
        %803 = vmatpush1.bf16.msra.mxu0 %v781
        %804 = vmatprep.subr.bf16.mxu0 0
        %805 = vmatpush1.bf16.msra.mxu0 %v782
        %806 = vmatprep.subr.bf16.mxu0 0
        %807 = vmatpush1.bf16.msra.mxu0 %v783
        %808 = vmatprep.subr.bf16.mxu0 0
        %809 = vmatpush1.bf16.msra.mxu0 0
        %810 = vmatprep.subr.bf16.mxu0 0
        %811 = vmatpush1.bf16.msra.mxu0 0
        %812 = vmatprep.subr.bf16.mxu0 0
        %813 = vmatpush1.bf16.msra.mxu0 0
        %814 = vmatprep.subr.bf16.mxu0 0
        %815 = vmatpush1.bf16.msra.mxu0 0
        %816 = vmatprep.subr.bf16.mxu0 0
        %817 = vmatpush1.bf16.msra.mxu0 0
        %818 = vmatprep.subr.bf16.mxu0 0
        %819 = vmatpush1.bf16.msra.mxu0 0
        %820 = vmatprep.subr.bf16.mxu0 0
        %821 = vmatpush1.bf16.msra.mxu0 0
        %822 = vmatprep.subr.bf16.mxu0 0
        %823 = vmatpush1.bf16.msra.mxu0 0
        %824 = vmatprep.mubr.bf16.mxu0 0
        %825 = vmatmul.mubr.bf16.gmra.mrb[0].mxu0 %v720
        %v826 = vpop.f32.mrb[0].mxu0
        %v827 = vadd.f32 %v742, %v826
        %v828 = vpop.f32.mrb[0].mxu0
        %v829 = vpop.f32.mrb[0].mxu0
        %v830 = vadd.f32 %v742, %v829
        %v831 = vpop.f32.mrb[0].mxu0
        %832 = vdwg.mxu0
        %v833 = vmax.f32 %v827, 0.0
        %v834 = vmax.f32 %v830, 0.0
        %v835 = vpack.c.bf16 %v834, %v833
        %v836 = vld [vmem:[%s9] sm:$0xf]
        %v837 = vld [vmem:[%s9 + $0x4] sm:$0xf]
        %v838 = vld [vmem:[%s9 + $0x8] sm:$0xf]
        %v839 = vld [vmem:[%s9 + $0xc] sm:$0xf]
        %v840 = vld [vmem:[%s9 + $0x10] sm:$0xf]
        %v841 = vld [vmem:[%s9 + $0x14] sm:$0xf]
        %v842 = vld [vmem:[%s9 + $0x18] sm:$0xf]
        %v843 = vld [vmem:[%s9 + $0x1c] sm:$0xf]
        %v844 = vld [vmem:[%s9 + $0x20] sm:$0xf]
        %v845 = vld [vmem:[%s9 + $0x24] sm:$0xf]
        %v846 = vld [vmem:[%s9 + $0x28] sm:$0xf]
        %v847 = vld [vmem:[%s9 + $0x2c] sm:$0xf]
        %v848 = vld [vmem:[%s9 + $0x30] sm:$0xf]
        %v849 = vld [vmem:[%s9 + $0x34] sm:$0xf]
        %v850 = vld [vmem:[%s9 + $0x38] sm:$0xf]
        %v851 = vld [vmem:[%s9 + $0x3c] sm:$0xf]
        %v852 = vld [vmem:[%s10] sm:$0x1]
        %v854 = vlaneseq
        %v855 = vshrl.u32 %v854, 7
        %v856 = vsub.s32 0, %v855
        %v857 = vrot.slane %v852, %v856
        %v875 = vunpack.c.l.b16 %v836
        %v876 = vunpack.c.l.b16 %v837
        %v877 = vunpack.c.l.b16 %v838
        %v878 = vunpack.c.l.b16 %v839
        %v879 = vunpack.c.l.b16 %v840
        %v880 = vunpack.c.l.b16 %v841
        %v881 = vunpack.c.l.b16 %v842
        %v882 = vunpack.c.l.b16 %v843
        %v883 = vunpack.c.l.b16 %v844
        %v884 = vunpack.c.l.b16 %v845
        %v885 = vunpack.c.l.b16 %v846
        %v886 = vunpack.c.l.b16 %v847
        %v887 = vunpack.c.l.b16 %v848
        %v888 = vunpack.c.l.b16 %v849
        %v889 = vunpack.c.l.b16 %v850
        %v890 = vunpack.c.l.b16 %v851
        %v891 = vpack.c.b16 %v876, %v875
        %v892 = vpack.c.b16 %v878, %v877
        %v893 = vpack.c.b16 %v880, %v879
        %v894 = vpack.c.b16 %v882, %v881
        %v895 = vpack.c.b16 %v884, %v883
        %v896 = vpack.c.b16 %v886, %v885
        %v897 = vpack.c.b16 %v888, %v887
        %v898 = vpack.c.b16 %v890, %v889
        %907 = vmatprep.subr.bf16.mxu0 0
        %908 = vmatpush1.bf16.msra.mxu0 %v891
        %909 = vmatprep.subr.bf16.mxu0 0
        %910 = vmatpush1.bf16.msra.mxu0 %v892
        %911 = vmatprep.subr.bf16.mxu0 0
        %912 = vmatpush1.bf16.msra.mxu0 %v893
        %913 = vmatprep.subr.bf16.mxu0 0
        %914 = vmatpush1.bf16.msra.mxu0 %v894
        %915 = vmatprep.subr.bf16.mxu0 0
        %916 = vmatpush1.bf16.msra.mxu0 %v895
        %917 = vmatprep.subr.bf16.mxu0 0
        %918 = vmatpush1.bf16.msra.mxu0 %v896
        %919 = vmatprep.subr.bf16.mxu0 0
        %920 = vmatpush1.bf16.msra.mxu0 %v897
        %921 = vmatprep.subr.bf16.mxu0 0
        %922 = vmatpush1.bf16.msra.mxu0 %v898
        %923 = vmatprep.subr.bf16.mxu0 0
        %924 = vmatpush1.bf16.msra.mxu0 0
        %925 = vmatprep.subr.bf16.mxu0 0
        %926 = vmatpush1.bf16.msra.mxu0 0
        %927 = vmatprep.subr.bf16.mxu0 0
        %928 = vmatpush1.bf16.msra.mxu0 0
        %929 = vmatprep.subr.bf16.mxu0 0
        %930 = vmatpush1.bf16.msra.mxu0 0
        %931 = vmatprep.subr.bf16.mxu0 0
        %932 = vmatpush1.bf16.msra.mxu0 0
        %933 = vmatprep.subr.bf16.mxu0 0
        %934 = vmatpush1.bf16.msra.mxu0 0
        %935 = vmatprep.subr.bf16.mxu0 0
        %936 = vmatpush1.bf16.msra.mxu0 0
        %937 = vmatprep.subr.bf16.mxu0 0
        %938 = vmatpush1.bf16.msra.mxu0 0
        %939 = vmatprep.mubr.bf16.mxu0 0
        %940 = vmatmul.mubr.bf16.gmra.mrb[0].mxu0 %v835
        %v941 = vpop.f32.mrb[0].mxu0
        %v942 = vadd.f32 %v857, %v941
        %v943 = vpop.f32.mrb[0].mxu0
        %v944 = vpop.f32.mrb[0].mxu0
        %v945 = vadd.f32 %v857, %v944
        %v946 = vpop.f32.mrb[0].mxu0
        %947 = vdwg.mxu0
        %948 = vst.msk [vmem:[%s418] sm:$0xff] %vm443, %v942
        %949 = vst.msk [vmem:[%s418 + $0x8] sm:$0xff] %vm443, %v945
        %s950 = smul.u32 2, %s24
        %p951 = scmp.lt.s32.totalorder %s950, 3
        %s952 = scalar_select %p951, %s950, 3
        %s953 = smul.addr %s952, 8
        %s954 = scalar_lea.vmem %s11, %s953
        // Predicated region
        $region73: #{_forward.1} parent=63 // pred_check
          %p955 = pneg %p278
        $region74: #{_forward.1} parent=63 // pred_check_branch
          %957 = sbr.rel (%p955) target = $region76
        $region75: #{_forward.1} parent=63 // pred_region
          %s958 = smul.u32 2, %s24
        $region76: #{_forward.1} parent=63 // pred_fallthru
          _
      $region64: #{_forward.1} parent=5 // pred_fallthru
        _
      %p959 = scmp.le.s32.totalorder 2, %s19
      // Predicated region
      $region77: #{_forward.1} parent=5 // pred_check
        %p960 = pneg %p959
      $region78: #{_forward.1} parent=5 // pred_check_branch
        %962 = sbr.rel (%p960) target = $region80
      $region79: #{_forward.1} parent=5 // pred_region
        %s963 = ssub.s32 %s19, 2
        // Predicated region
        $region81: #{_forward.1} parent=79 // pred_check
          %p964 = pneg %p284
        $region82: #{_forward.1} parent=79 // pred_check_branch
          %966 = sbr.rel (%p964) target = $region84
        $region83: #{_forward.1} parent=79 // pred_region
          %s967 = smul.u32 2, %s25
          %p968 = scmp.lt.s32.totalorder %s967, 3
          %s969 = scalar_select %p968, %s967, 3
          %s970 = smul.addr %s969, 8
          %s971 = scalar_lea.vmem %s11, %s970
        $region84: #{_forward.1} parent=79 // pred_fallthru
          _
      $region80: #{_forward.1} parent=5 // pred_fallthru
        _
    $region6: #{_forward.1} parent=1 // loop_footer
      %s23 = sadd.s32 1, %s19
    $region7: #{_forward.1} parent=1 // loop_footer_branch
      %18 = sbr.rel target = $region3
    $region8: #{_forward.1} parent=1 // loop_exit
      _
    %972 = vsyncpa [#allocation3], 1
    %s973 = scalar_lea.sflag [#allocation3], 1
    %974 = vsyncpa %s973, 1
    %975 = vsyncpa [#allocation5], 1

</llo_original>
